<compile_context>
chip_gen: v7x
topology: tpu7x:2x2x1
jax: 0.10.0
libtpu: 0.0.40
codegen_flags: <defaults>
</compile_context>

<pallas_src>
import jax
import jax.numpy as jnp
from jax.experimental import pallas as pl
from jax.experimental.pallas import tpu as pltpu


# --------------------------------------------------------------------------- #
# Helpers
# --------------------------------------------------------------------------- #
def _relu_flags(num_layers):
    # PyTorch module: ReLU after every layer except the last; the first layer always
    # has a ReLU (even in the degenerate num_layers == 1 case).
    return [(i == 0) or (i != num_layers - 1) for i in range(num_layers)]


def _round_up(n, m):
    return ((n + m - 1) // m) * m


# --------------------------------------------------------------------------- #
# Kernel
# --------------------------------------------------------------------------- #
def _make_mlp_cell_kernel(num_layers, matmul_dtype):
    relu = _relu_flags(num_layers)

    def kernel(hid_ref, inp_ref, *rest):
        # rest = (w0_h, w0_x, b0, w1, b1, ..., w_{L-1}, b_{L-1}, out_ref)
        out_ref = rest[-1]
        p = rest[:-1]

        # Layer 0: concat([hidden, input]) @ W0  ==  hidden @ W0_h + input @ W0_x
        h = (
            jnp.dot(hid_ref[...].astype(matmul_dtype), p[0][...],
                    preferred_element_type=jnp.float32)
            + jnp.dot(inp_ref[...].astype(matmul_dtype), p[1][...],
                      preferred_element_type=jnp.float32)
            + p[2][...]
        )
        if relu[0]:
            h = jnp.maximum(h, 0.0)

        idx = 3
        for i in range(1, num_layers):
            w = p[idx][...]
            b = p[idx + 1][...]
            idx += 2
            h = jnp.dot(h.astype(matmul_dtype), w,
                        preferred_element_type=jnp.float32) + b
            if relu[i]:
                h = jnp.maximum(h, 0.0)

        # Residual: re-read hidden here (short live range).  Both hidden and h have
        # exactly-zero padded lanes, so this lane-dense (unmasked) store is exact
        # once the wrapper slices [:, :latent].
        out_ref[...] = hid_ref[...] + 0.1 * h

    return kernel


# --------------------------------------------------------------------------- #
# One-time parameter preparation (do this once, outside the per-step hot path)
# --------------------------------------------------------------------------- #
def prepare_params(weights, biases, latent_size, *, matmul_dtype=jnp.bfloat16,
                   lane_pad=128):
    """Splits W0 into hidden-rows / input-rows halves (removes the concat), zero-pads
    ALL layer output widths (including the last) and the hidden-rows of W0 to a
    multiple of `lane_pad`, and casts weights to the matmul dtype (biases stay f32).

    Returns (flat_params, latent_pad)."""
    num_layers = len(weights)
    out_orig = [w.shape[1] for w in weights]
    out_dims = [_round_up(o, lane_pad) for o in out_orig]
    latent_pad = _round_up(latent_size, lane_pad)

    flat = []
    for i, (w, b) in enumerate(zip(weights, biases)):
        w = jnp.asarray(w, jnp.float32)
        fan_in, fan_out = w.shape
        out_p = out_dims[i]
        b_p = jnp.zeros((1, out_p), jnp.float32).at[:, :fan_out].set(
            jnp.asarray(b, jnp.float32).reshape(1, -1))
        if i == 0:
            # Hidden-rows half padded to latent_pad rows (wrapper pads `hidden` too).
            w_h = jnp.zeros((latent_pad, out_p), jnp.float32
                            ).at[:latent_size, :fan_out].set(w[:latent_size])
            w_x = jnp.zeros((fan_in - latent_size, out_p), jnp.float32
                            ).at[:, :fan_out].set(w[latent_size:])
            flat += [w_h.astype(matmul_dtype), w_x.astype(matmul_dtype), b_p]
        else:
            in_p = out_dims[i - 1]
            w_pd = jnp.zeros((in_p, out_p), jnp.float32
                             ).at[:fan_in, :fan_out].set(w)
            flat += [w_pd.astype(matmul_dtype), b_p]
    return tuple(flat), latent_pad


# --------------------------------------------------------------------------- #
# Pallas wrapper
# --------------------------------------------------------------------------- #
def mlp_cell_forward(inp, hidden, prepared, num_layers, *, block_batch=1024):
    """MLPCell.forward(input, hidden) with prepared (split/padded) parameters.

    inp:    (B, input_size)
    hidden: (B, latent_size)
    returns (B, latent_size) float32
    """
    params, latent_pad = prepared
    matmul_dtype = params[0].dtype
    B, latent = hidden.shape
    _, in_sz = inp.shape

    hidden_f = hidden.astype(jnp.float32)
    inp_f = inp.astype(jnp.float32)
    if latent_pad != latent:
        hidden_f = jnp.pad(hidden_f, ((0, 0), (0, latent_pad - latent)))

    # ----- batch tiling: aim for >= 2 grid steps so both v7x TCs get work ---------
    block_batch = max(8, (block_batch // 8) * 8)
    half = _round_up(max(1, (B + 1) // 2), 8)
    tb = min(block_batch, max(8, half))
    b_pad = _round_up(B, tb)
    if b_pad != B:
        pad = b_pad - B
        hidden_f = jnp.pad(hidden_f, ((0, pad), (0, 0)))
        inp_f = jnp.pad(inp_f, ((0, pad), (0, 0)))
    grid = (b_pad // tb,)

    def act_spec(feat):
        return pl.BlockSpec((tb, feat), lambda i: (i, 0))

    def const_spec(arr):
        # Same block for every grid step -> VMEM-resident across batch tiles.
        # Single-buffered (no re-DMA), halving resident-weight VMEM (matters on v7x).
        return pl.BlockSpec(arr.shape, lambda i: (0, 0),
                            pipeline_mode=pl.Buffered(1))

    in_specs = [act_spec(latent_pad), act_spec(in_sz)] + \
               [const_spec(a) for a in params]
    out_specs = act_spec(latent_pad)

    # ----- generation-aware VMEM budget -------------------------------------------
    param_bytes = sum(int(a.size) * a.dtype.itemsize for a in params)
    max_width = max(a.shape[-1] for a in params)
    mm_bytes = jnp.dtype(matmul_dtype).itemsize
    est_vmem = (2 * tb * 4 * (2 * latent_pad + in_sz)          # dbl-buffered act tiles
                + 1 * param_bytes                              # single-buffered params
                + 2 * tb * max_width * (4 + mm_bytes))         # live intermediates
    try:
        phys_vmem = pltpu.get_tpu_info().vmem_capacity_bytes
    except Exception:
        phys_vmem = 64 * 1024 * 1024                           # v7x per-TC lower bound
    cap = (phys_vmem * 3) // 4                                 # leave Mosaic headroom
    vmem_limit = int(min(cap, max(est_vmem * 3 // 2, 32 * 1024 * 1024)))

    compiler_params = pltpu.CompilerParams(
        dimension_semantics=("parallel",),
        vmem_limit_bytes=vmem_limit)

    kernel = _make_mlp_cell_kernel(num_layers, matmul_dtype)
    out = pl.pallas_call(
        kernel,
        out_shape=jax.ShapeDtypeStruct((b_pad, latent_pad), jnp.float32),
        grid=grid,
        in_specs=in_specs,
        out_specs=out_specs,
        compiler_params=compiler_params,
    )(hidden_f, inp_f, *params)

    return out[:B, :latent]


# --------------------------------------------------------------------------- #
# Init + pure-JAX reference
# --------------------------------------------------------------------------- #
def init_mlp_cell_params(key, input_size, num_layers, layer_hidden_size, latent_size):
    """nn.Linear-style init (uniform +/- 1/sqrt(fan_in)); W stored as (in, out)."""
    dims = []
    for i in range(num_layers):
        if i == 0:
            dims.append((input_size + latent_size, layer_hidden_size))
        elif i == num_layers - 1:
            dims.append((layer_hidden_size, latent_size))
        else:
            dims.append((layer_hidden_size, layer_hidden_size))

    weights, biases = [], []
    for (fan_in, fan_out) in dims:
        key, kw, kb = jax.random.split(key, 3)
        bound = 1.0 / jnp.sqrt(jnp.float32(fan_in))
        weights.append(jax.random.uniform(kw, (fan_in, fan_out), jnp.float32,
                                          -bound, bound))
        biases.append(jax.random.uniform(kb, (1, fan_out), jnp.float32,
                                         -bound, bound))
    return weights, biases


def mlp_cell_reference(inp, hidden, weights, biases):
    h = jnp.concatenate([hidden, inp], axis=1).astype(jnp.float32)
    relu = _relu_flags(len(weights))
    for i, (w, b) in enumerate(zip(weights, biases)):
        h = h @ w + b
        if relu[i]:
            h = jnp.maximum(h, 0.0)
    return hidden.astype(jnp.float32) + 0.1 * h


# --------------------------------------------------------------------------- #
if __name__ == "__main__":
    batch = 2
    input_size = 4
    latent_size = 8
    layer_hidden_size = 32
    num_layers = 3

    key = jax.random.PRNGKey(0)
    key, k_in, k_hid, k_params = jax.random.split(key, 4)

    inp = jax.random.normal(k_in, (batch, input_size), jnp.float32)
    hidden = jax.random.normal(k_hid, (batch, latent_size), jnp.float32)
    weights, biases = init_mlp_cell_params(
        k_params, input_size, num_layers, layer_hidden_size, latent_size)

    ref = mlp_cell_reference(inp, hidden, weights, biases)

    # 1) f32 matmul path — exact match to the reference (zero-padding is exact).
    prepared_f32 = prepare_params(weights, biases, latent_size,
                                  matmul_dtype=jnp.float32)
    out = jax.block_until_ready(
        mlp_cell_forward(inp, hidden, prepared_f32, num_layers))
    assert out.shape == (batch, latent_size)
    assert jnp.allclose(out, ref, atol=1e-5, rtol=1e-5), "f32 path mismatch"

    # 2) Default bf16 matmul path (MXU-native) — f32 accumulation, looser tolerance.
    prepared_bf16 = prepare_params(weights, biases, latent_size)   # bf16 default
    out_bf16 = jax.block_until_ready(
        mlp_cell_forward(inp, hidden, prepared_bf16, num_layers))
    assert jnp.allclose(out_bf16, ref, atol=5e-2, rtol=5e-2), "bf16 path mismatch"

    # 3) Larger, non-multiple-of-tile batch exercises the multi-step grid
    #    (>= 2 steps -> both v7x TCs), padding/slicing, and resident weights.
    b_big = 1000
    k1, k2 = jax.random.split(key)
    inp_b = jax.random.normal(k1, (b_big, input_size), jnp.float32)
    hid_b = jax.random.normal(k2, (b_big, latent_size), jnp.float32)
    out_b = jax.block_until_ready(
        mlp_cell_forward(inp_b, hid_b, prepared_f32, num_layers, block_batch=1024))
    ref_b = mlp_cell_reference(inp_b, hid_b, weights, biases)
    assert out_b.shape == (b_big, latent_size)
    assert jnp.allclose(out_b, ref_b, atol=1e-5, rtol=1e-5), "tiled path mismatch"

    print("KERNEL_OK")
</pallas_src>

<mosaic_0001>
module attributes {stable_mosaic.version = 11 : i64} {
  func.func @kernel(%arg0: i32, %arg1: memref<8x128xf32, #tpu.memory_space<vmem>>, %arg2: memref<8x4xf32, #tpu.memory_space<vmem>>, %arg3: memref<128x128xf32, #tpu.memory_space<vmem>>, %arg4: memref<4x128xf32, #tpu.memory_space<vmem>>, %arg5: memref<1x128xf32, #tpu.memory_space<vmem>>, %arg6: memref<128x128xf32, #tpu.memory_space<vmem>>, %arg7: memref<1x128xf32, #tpu.memory_space<vmem>>, %arg8: memref<128x128xf32, #tpu.memory_space<vmem>>, %arg9: memref<1x128xf32, #tpu.memory_space<vmem>>, %arg10: memref<8x128xf32, #tpu.memory_space<vmem>>) attributes {dimension_semantics = [#tpu.dimension_semantics<parallel>], iteration_bounds = array<i64: 1>, scalar_prefetch = 0 : i64, scratch_operands = 0 : i64, tpu.core_type = #tpu.core_type<tc>, window_params = [{transform_indices = @transform_0, window_bounds = array<i64: 8, 128>}, {transform_indices = @transform_1, window_bounds = array<i64: 8, 4>}, {pipeline_mode = #tpu.pipeline_mode<synchronous>, transform_indices = @transform_2, window_bounds = array<i64: 128, 128>}, {pipeline_mode = #tpu.pipeline_mode<synchronous>, transform_indices = @transform_3, window_bounds = array<i64: 4, 128>}, {pipeline_mode = #tpu.pipeline_mode<synchronous>, transform_indices = @transform_4, window_bounds = array<i64: 1, 128>}, {pipeline_mode = #tpu.pipeline_mode<synchronous>, transform_indices = @transform_5, window_bounds = array<i64: 128, 128>}, {pipeline_mode = #tpu.pipeline_mode<synchronous>, transform_indices = @transform_6, window_bounds = array<i64: 1, 128>}, {pipeline_mode = #tpu.pipeline_mode<synchronous>, transform_indices = @transform_7, window_bounds = array<i64: 128, 128>}, {pipeline_mode = #tpu.pipeline_mode<synchronous>, transform_indices = @transform_8, window_bounds = array<i64: 1, 128>}, {transform_indices = @transform_9, window_bounds = array<i64: 8, 128>}]} {
    %c0 = arith.constant 0 : index
    %c0_0 = arith.constant 0 : index
    %0 = vector.load %arg1[%c0, %c0_0] : memref<8x128xf32, #tpu.memory_space<vmem>>, vector<8x128xf32>
    %c0_1 = arith.constant 0 : index
    %c0_2 = arith.constant 0 : index
    %1 = vector.load %arg3[%c0_1, %c0_2] : memref<128x128xf32, #tpu.memory_space<vmem>>, vector<128x128xf32>
    %cst = arith.constant dense<0.000000e+00> : vector<8x128xf32>
    %2 = tpu.matmul %0, %1, %cst {dimension_numbers = #tpu.dot_dimension_numbers<[1], [0], [0], [1], [0, 0, 1, 1], [], []>} : vector<8x128xf32>, vector<128x128xf32>, vector<8x128xf32> -> vector<8x128xf32>
    %c0_3 = arith.constant 0 : index
    %c0_4 = arith.constant 0 : index
    %3 = vector.load %arg2[%c0_3, %c0_4] : memref<8x4xf32, #tpu.memory_space<vmem>>, vector<8x4xf32>
    %c0_5 = arith.constant 0 : index
    %c0_6 = arith.constant 0 : index
    %4 = vector.load %arg4[%c0_5, %c0_6] : memref<4x128xf32, #tpu.memory_space<vmem>>, vector<4x128xf32>
    %cst_7 = arith.constant dense<0.000000e+00> : vector<8x128xf32>
    %5 = tpu.matmul %3, %4, %cst_7 {dimension_numbers = #tpu.dot_dimension_numbers<[1], [0], [0], [1], [0, 0, 1, 1], [], []>} : vector<8x4xf32>, vector<4x128xf32>, vector<8x128xf32> -> vector<8x128xf32>
    %6 = arith.addf %2, %5 : vector<8x128xf32>
    %c0_8 = arith.constant 0 : index
    %c0_9 = arith.constant 0 : index
    %7 = vector.load %arg5[%c0_8, %c0_9] : memref<1x128xf32, #tpu.memory_space<vmem>>, vector<1x128xf32>
    %8 = vector.broadcast %7 : vector<1x128xf32> to vector<8x128xf32>
    %9 = arith.addf %6, %8 : vector<8x128xf32>
    %cst_10 = arith.constant 0.000000e+00 : f32
    %10 = vector.broadcast %cst_10 : f32 to vector<8x128xf32>
    %11 = arith.maximumf %9, %10 : vector<8x128xf32>
    %c0_11 = arith.constant 0 : index
    %c0_12 = arith.constant 0 : index
    %12 = vector.load %arg6[%c0_11, %c0_12] : memref<128x128xf32, #tpu.memory_space<vmem>>, vector<128x128xf32>
    %c0_13 = arith.constant 0 : index
    %c0_14 = arith.constant 0 : index
    %13 = vector.load %arg7[%c0_13, %c0_14] : memref<1x128xf32, #tpu.memory_space<vmem>>, vector<1x128xf32>
    %cst_15 = arith.constant dense<0.000000e+00> : vector<8x128xf32>
    %14 = tpu.matmul %11, %12, %cst_15 {dimension_numbers = #tpu.dot_dimension_numbers<[1], [0], [0], [1], [0, 0, 1, 1], [], []>} : vector<8x128xf32>, vector<128x128xf32>, vector<8x128xf32> -> vector<8x128xf32>
    %15 = vector.broadcast %13 : vector<1x128xf32> to vector<8x128xf32>
    %16 = arith.addf %14, %15 : vector<8x128xf32>
    %cst_16 = arith.constant 0.000000e+00 : f32
    %17 = vector.broadcast %cst_16 : f32 to vector<8x128xf32>
    %18 = arith.maximumf %16, %17 : vector<8x128xf32>
    %c0_17 = arith.constant 0 : index
    %c0_18 = arith.constant 0 : index
    %19 = vector.load %arg8[%c0_17, %c0_18] : memref<128x128xf32, #tpu.memory_space<vmem>>, vector<128x128xf32>
    %c0_19 = arith.constant 0 : index
    %c0_20 = arith.constant 0 : index
    %20 = vector.load %arg9[%c0_19, %c0_20] : memref<1x128xf32, #tpu.memory_space<vmem>>, vector<1x128xf32>
    %cst_21 = arith.constant dense<0.000000e+00> : vector<8x128xf32>
    %21 = tpu.matmul %18, %19, %cst_21 {dimension_numbers = #tpu.dot_dimension_numbers<[1], [0], [0], [1], [0, 0, 1, 1], [], []>} : vector<8x128xf32>, vector<128x128xf32>, vector<8x128xf32> -> vector<8x128xf32>
    %22 = vector.broadcast %20 : vector<1x128xf32> to vector<8x128xf32>
    %23 = arith.addf %21, %22 : vector<8x128xf32>
    %c0_22 = arith.constant 0 : index
    %c0_23 = arith.constant 0 : index
    %24 = vector.load %arg1[%c0_22, %c0_23] : memref<8x128xf32, #tpu.memory_space<vmem>>, vector<8x128xf32>
    %cst_24 = arith.constant 1.000000e-01 : f32
    %25 = vector.broadcast %cst_24 : f32 to vector<8x128xf32>
    %26 = arith.mulf %25, %23 : vector<8x128xf32>
    %27 = arith.addf %24, %26 : vector<8x128xf32>
    %c0_25 = arith.constant 0 : index
    %c0_26 = arith.constant 0 : index
    %28 = vector.load %arg10[%c0_25, %c0_26] : memref<8x128xf32, #tpu.memory_space<vmem>>, vector<8x128xf32>
    tpu.vector_store %arg10[%c0_25, %c0_26], %27 {strides = array<i32>} : memref<8x128xf32, #tpu.memory_space<vmem>>, vector<8x128xf32>,
    return
  }
  func.func @transform_0(%arg0: i32) -> (i32, i32) {
    %c0_i32 = arith.constant 0 : i32
    %c0_i32_0 = arith.constant 0 : i32
    return %arg0, %c0_i32 : i32, i32
  }
  func.func @transform_1(%arg0: i32) -> (i32, i32) {
    %c0_i32 = arith.constant 0 : i32
    %c0_i32_0 = arith.constant 0 : i32
    return %arg0, %c0_i32 : i32, i32
  }
  func.func @transform_2(%arg0: i32) -> (i32, i32) {
    %c0_i32 = arith.constant 0 : i32
    %c0_i32_0 = arith.constant 0 : i32
    %c0_i32_1 = arith.constant 0 : i32
    return %c0_i32, %c0_i32_0 : i32, i32
  }
  func.func @transform_3(%arg0: i32) -> (i32, i32) {
    %c0_i32 = arith.constant 0 : i32
    %c0_i32_0 = arith.constant 0 : i32
    %c0_i32_1 = arith.constant 0 : i32
    return %c0_i32, %c0_i32_0 : i32, i32
  }
  func.func @transform_4(%arg0: i32) -> (i32, i32) {
    %c0_i32 = arith.constant 0 : i32
    %c0_i32_0 = arith.constant 0 : i32
    %c0_i32_1 = arith.constant 0 : i32
    return %c0_i32, %c0_i32_0 : i32, i32
  }
  func.func @transform_5(%arg0: i32) -> (i32, i32) {
    %c0_i32 = arith.constant 0 : i32
    %c0_i32_0 = arith.constant 0 : i32
    %c0_i32_1 = arith.constant 0 : i32
    return %c0_i32, %c0_i32_0 : i32, i32
  }
  func.func @transform_6(%arg0: i32) -> (i32, i32) {
    %c0_i32 = arith.constant 0 : i32
    %c0_i32_0 = arith.constant 0 : i32
    %c0_i32_1 = arith.constant 0 : i32
    return %c0_i32, %c0_i32_0 : i32, i32
  }
  func.func @transform_7(%arg0: i32) -> (i32, i32) {
    %c0_i32 = arith.constant 0 : i32
    %c0_i32_0 = arith.constant 0 : i32
    %c0_i32_1 = arith.constant 0 : i32
    return %c0_i32, %c0_i32_0 : i32, i32
  }
  func.func @transform_8(%arg0: i32) -> (i32, i32) {
    %c0_i32 = arith.constant 0 : i32
    %c0_i32_0 = arith.constant 0 : i32
    %c0_i32_1 = arith.constant 0 : i32
    return %c0_i32, %c0_i32_0 : i32, i32
  }
  func.func @transform_9(%arg0: i32) -> (i32, i32) {
    %c0_i32 = arith.constant 0 : i32
    %c0_i32_0 = arith.constant 0 : i32
    return %arg0, %c0_i32 : i32, i32
  }
}

</mosaic_0001>

<llo_original>
// kernel: tpu_custom_call.1
$region0: #{tpu_custom_call.1}
  #allocation0 [shape = 'u32[]', space=smem, size = 0x4, offset = 0x4, fixed_abs, tag = 'smem constant byte address 0x4 - core index']
  #allocation1 [shape = 'u32[144,128]{1,0:T(1,128)}', space=vmem, size = 0x12000, scoped, tag = 'internal scratch']
  %s0 = inlined_call_operand.vmem [shape: f32[8,128], index: 0, kind: input, shape index: {}]
  %s1 = inlined_call_operand.vmem [shape: f32[8,4], index: 1, kind: input, shape index: {}]
  %s2 = inlined_call_operand.hbm [shape: f32[128,128], index: 2, kind: input, shape index: {}]
  %s3 = inlined_call_operand.vmem [shape: f32[4,128], index: 3, kind: input, shape index: {}]
  %s4 = inlined_call_operand.vmem [shape: f32[1,128], index: 4, kind: input, shape index: {}]
  %s5 = inlined_call_operand.hbm [shape: f32[128,128], index: 5, kind: input, shape index: {}]
  %s6 = inlined_call_operand.vmem [shape: f32[1,128], index: 6, kind: input, shape index: {}]
  %s7 = inlined_call_operand.hbm [shape: f32[128,128], index: 7, kind: input, shape index: {}]
  %s8 = inlined_call_operand.vmem [shape: f32[1,128], index: 8, kind: input, shape index: {}]
  %s9 = inlined_call_operand.hbm [shape: f32[8,128], index: 9, kind: output, shape index: {}]
  %s10 = sld [smem:[#allocation0]]
  $region58: #{tpu_custom_call.1} parent=0
    _
  %s12 = ssub.s32 1, %s10
  %s13 = scalar_select 0, %s12, %s10
  $region1: #{tpu_custom_call.1} parent=0
    #allocation2 [shape = 'u8[65536]{0}', space=vmem, size = 0x10000, scoped, tag = 'input window, operand 2, single buffered']
    #allocation3 [shape = 's32[1]{0}', space=sflag, size = 0x4, scoped, tag = 'scoped memory for tpu_custom_call.1']
    #allocation4 [shape = 's32[1]{0}', space=sflag, size = 0x4, scoped, tag = 'scoped memory for tpu_custom_call.1']
    #allocation5 [shape = 'u8[65536]{0}', space=vmem, size = 0x10000, scoped, tag = 'input window, operand 5, single buffered']
    #allocation6 [shape = 's32[1]{0}', space=sflag, size = 0x4, scoped, tag = 'scoped memory for tpu_custom_call.1']
    #allocation7 [shape = 'u8[65536]{0}', space=vmem, size = 0x10000, scoped, tag = 'input window, operand 7, single buffered']
    #allocation8 [shape = 'u8[4096]{0}', space=vmem, size = 0x1000, scoped, tag = 'output window, operand 0, single buffered']
    %14 = vsyncpa [#allocation3], 0
    %15 = vsyncpa [#allocation6], 0
    %16 = vsyncpa [#allocation4], 0
    // Predicated region
    $region2: #{tpu_custom_call.1} parent=1 // pred_check
      _
    $region3: #{tpu_custom_call.1} parent=1 // pred_check_branch
      %18 = sbr.rel (0) target = $region5
    $region4: #{tpu_custom_call.1} parent=1 // pred_region
      _
    $region5: #{tpu_custom_call.1} parent=1 // pred_fallthru
      _
    // Predicated region
    $region6: #{tpu_custom_call.1} parent=1 // pred_check
      _
    $region7: #{tpu_custom_call.1} parent=1 // pred_check_branch
      %20 = sbr.rel (0) target = $region9
    $region8: #{tpu_custom_call.1} parent=1 // pred_region
      _
    $region9: #{tpu_custom_call.1} parent=1 // pred_fallthru
      _
    // Predicated region
    $region10: #{tpu_custom_call.1} parent=1 // pred_check
      _
    $region11: #{tpu_custom_call.1} parent=1 // pred_check_branch
      %22 = sbr.rel (0) target = $region13
    $region12: #{tpu_custom_call.1} parent=1 // pred_region
      %s24 = ssub.s32 2048, 2048
      %25 = vsyncadd [#allocation3], %s24
      %s26 = sshll.u32 [#allocation2], 4
      %s27 = int_to_ptr.vmem [resolvable:$true] %s26
      %32 = dma.hbm_to_vmem [thread:$0]  %s2, 2048, %s27, [#allocation3], 128, 128, 8
    $region13: #{tpu_custom_call.1} parent=1 // pred_fallthru
      _
    // Predicated region
    $region14: #{tpu_custom_call.1} parent=1 // pred_check
      _
    $region15: #{tpu_custom_call.1} parent=1 // pred_check_branch
      %34 = sbr.rel (0) target = $region17
    $region16: #{tpu_custom_call.1} parent=1 // pred_region
      _
    $region17: #{tpu_custom_call.1} parent=1 // pred_fallthru
      _
    // Predicated region
    $region18: #{tpu_custom_call.1} parent=1 // pred_check
      _
    $region19: #{tpu_custom_call.1} parent=1 // pred_check_branch
      %36 = sbr.rel (0) target = $region21
    $region20: #{tpu_custom_call.1} parent=1 // pred_region
      _
    $region21: #{tpu_custom_call.1} parent=1 // pred_fallthru
      _
    // Predicated region
    $region22: #{tpu_custom_call.1} parent=1 // pred_check
      _
    $region23: #{tpu_custom_call.1} parent=1 // pred_check_branch
      %38 = sbr.rel (0) target = $region25
    $region24: #{tpu_custom_call.1} parent=1 // pred_region
      %s40 = ssub.s32 2048, 2048
      %41 = vsyncadd [#allocation6], %s40
      %s42 = sshll.u32 [#allocation5], 4
      %s43 = int_to_ptr.vmem [resolvable:$true] %s42
      %48 = dma.hbm_to_vmem [thread:$0]  %s5, 2048, %s43, [#allocation6], 128, 128, 8
    $region25: #{tpu_custom_call.1} parent=1 // pred_fallthru
      _
    // Predicated region
    $region26: #{tpu_custom_call.1} parent=1 // pred_check
      _
    $region27: #{tpu_custom_call.1} parent=1 // pred_check_branch
      %50 = sbr.rel (0) target = $region29
    $region28: #{tpu_custom_call.1} parent=1 // pred_region
      _
    $region29: #{tpu_custom_call.1} parent=1 // pred_fallthru
      _
    // Predicated region
    $region30: #{tpu_custom_call.1} parent=1 // pred_check
      _
    $region31: #{tpu_custom_call.1} parent=1 // pred_check_branch
      %52 = sbr.rel (0) target = $region33
    $region32: #{tpu_custom_call.1} parent=1 // pred_region
      %s54 = ssub.s32 2048, 2048
      %55 = vsyncadd [#allocation6], %s54
      %s56 = sshll.u32 [#allocation7], 4
      %s57 = int_to_ptr.vmem [resolvable:$true] %s56
      %62 = dma.hbm_to_vmem [thread:$0]  %s7, 2048, %s57, [#allocation6], 128, 128, 8
    $region33: #{tpu_custom_call.1} parent=1 // pred_fallthru
      _
    // Predicated region
    $region34: #{tpu_custom_call.1} parent=1 // pred_check
      _
    $region35: #{tpu_custom_call.1} parent=1 // pred_check_branch
      %64 = sbr.rel (0) target = $region37
    $region36: #{tpu_custom_call.1} parent=1 // pred_region
      _
    $region37: #{tpu_custom_call.1} parent=1 // pred_fallthru
      _
    // Predicated region
    $region38: #{tpu_custom_call.1} parent=1 // pred_check
      _
    $region39: #{tpu_custom_call.1} parent=1 // pred_check_branch
      %66 = sbr.rel (0) target = $region41
    $region40: #{tpu_custom_call.1} parent=1 // pred_region
      %67 = dma.done [#allocation3], 2048
    $region41: #{tpu_custom_call.1} parent=1 // pred_fallthru
      _
    // Predicated region
    $region42: #{tpu_custom_call.1} parent=1 // pred_check
      _
    $region43: #{tpu_custom_call.1} parent=1 // pred_check_branch
      %69 = sbr.rel (0) target = $region45
    $region44: #{tpu_custom_call.1} parent=1 // pred_region
      %70 = dma.done [#allocation6], 2048
    $region45: #{tpu_custom_call.1} parent=1 // pred_fallthru
      _
    // Predicated region
    $region46: #{tpu_custom_call.1} parent=1 // pred_check
      _
    $region47: #{tpu_custom_call.1} parent=1 // pred_check_branch
      %72 = sbr.rel (0) target = $region49
    $region48: #{tpu_custom_call.1} parent=1 // pred_region
      %73 = dma.done [#allocation6], 2048
    $region49: #{tpu_custom_call.1} parent=1 // pred_fallthru
      _
    %v74 = vld [vmem:[%s0] sm:$0xff]
    %v75 = vld [vmem:[#allocation2] sm:$0xff]
    %v76 = vld [vmem:[#allocation2 + $0x8] sm:$0xff]
    %v77 = vld [vmem:[#allocation2 + $0x10] sm:$0xff]
    %v78 = vld [vmem:[#allocation2 + $0x18] sm:$0xff]
    %v79 = vld [vmem:[#allocation2 + $0x20] sm:$0xff]
    %v80 = vld [vmem:[#allocation2 + $0x28] sm:$0xff]
    %v81 = vld [vmem:[#allocation2 + $0x30] sm:$0xff]
    %v82 = vld [vmem:[#allocation2 + $0x38] sm:$0xff]
    %v83 = vld [vmem:[#allocation2 + $0x40] sm:$0xff]
    %v84 = vld [vmem:[#allocation2 + $0x48] sm:$0xff]
    %v85 = vld [vmem:[#allocation2 + $0x50] sm:$0xff]
    %v86 = vld [vmem:[#allocation2 + $0x58] sm:$0xff]
    %v87 = vld [vmem:[#allocation2 + $0x60] sm:$0xff]
    %v88 = vld [vmem:[#allocation2 + $0x68] sm:$0xff]
    %v89 = vld [vmem:[#allocation2 + $0x70] sm:$0xff]
    %v90 = vld [vmem:[#allocation2 + $0x78] sm:$0xff]
    %v91 = vld [vmem:[%s1] sm:$0xff]
    %v92 = vld [vmem:[%s3] sm:$0xf]
    %vm93 = vcmask 31744
    %v95 = vsel %vm93, %v91, 0
    %vm97 = vcmask 1043456
    %v99 = vsel %vm97, %v92, 0
    %101 = vmatprep.subr.mxu0 0.0
    %102 = vmatpush1.msra.mxu0 %v99
    %103 = vmatprep.subr.mxu0 0.0
    %104 = vmatpush1.msra.mxu0 0.0
    %105 = vmatprep.subr.mxu0 0.0
    %106 = vmatpush1.msra.mxu0 0.0
    %107 = vmatprep.subr.mxu0 0.0
    %108 = vmatpush1.msra.mxu0 0.0
    %109 = vmatprep.subr.mxu0 0.0
    %110 = vmatpush1.msra.mxu0 0.0
    %111 = vmatprep.subr.mxu0 0.0
    %112 = vmatpush1.msra.mxu0 0.0
    %113 = vmatprep.subr.mxu0 0.0
    %114 = vmatpush1.msra.mxu0 0.0
    %115 = vmatprep.subr.mxu0 0.0
    %116 = vmatpush1.msra.mxu0 0.0
    %117 = vmatprep.subr.mxu0 0.0
    %118 = vmatpush1.msra.mxu0 0.0
    %119 = vmatprep.subr.mxu0 0.0
    %120 = vmatpush1.msra.mxu0 0.0
    %121 = vmatprep.subr.mxu0 0.0
    %122 = vmatpush1.msra.mxu0 0.0
    %123 = vmatprep.subr.mxu0 0.0
    %124 = vmatpush1.msra.mxu0 0.0
    %125 = vmatprep.subr.mxu0 0.0
    %126 = vmatpush1.msra.mxu0 0.0
    %127 = vmatprep.subr.mxu0 0.0
    %128 = vmatpush1.msra.mxu0 0.0
    %129 = vmatprep.subr.mxu0 0.0
    %130 = vmatpush1.msra.mxu0 0.0
    %131 = vmatprep.subr.mxu0 0.0
    %132 = vmatpush1.msra.mxu0 0.0
    %133 = vmatprep.subr.mxu0 0.0
    %134 = vmatpush1.msra.mxu0 0.0
    %135 = vmatprep.subr.mxu0 0.0
    %136 = vmatpush1.msra.mxu0 0.0
    %137 = vmatprep.subr.mxu0 0.0
    %138 = vmatpush1.msra.mxu0 0.0
    %139 = vmatprep.subr.mxu0 0.0
    %140 = vmatpush1.msra.mxu0 0.0
    %141 = vmatprep.subr.mxu0 0.0
    %142 = vmatpush1.msra.mxu0 0.0
    %143 = vmatprep.subr.mxu0 0.0
    %144 = vmatpush1.msra.mxu0 0.0
    %145 = vmatprep.subr.mxu0 0.0
    %146 = vmatpush1.msra.mxu0 0.0
    %147 = vmatprep.subr.mxu0 0.0
    %148 = vmatpush1.msra.mxu0 0.0
    %149 = vmatprep.subr.mxu0 0.0
    %150 = vmatpush1.msra.mxu0 0.0
    %151 = vmatprep.subr.mxu0 0.0
    %152 = vmatpush1.msra.mxu0 0.0
    %153 = vmatprep.subr.mxu0 0.0
    %154 = vmatpush1.msra.mxu0 0.0
    %155 = vmatprep.subr.mxu0 0.0
    %156 = vmatpush1.msra.mxu0 0.0
    %157 = vmatprep.subr.mxu0 0.0
    %158 = vmatpush1.msra.mxu0 0.0
    %159 = vmatprep.subr.mxu0 0.0
    %160 = vmatpush1.msra.mxu0 0.0
    %161 = vmatprep.subr.mxu0 0.0
    %162 = vmatpush1.msra.mxu0 0.0
    %163 = vmatprep.subr.mxu0 0.0
    %164 = vmatpush1.msra.mxu0 0.0
    %165 = vmatprep.mubr.f32.mxu0 0.0
    %166 = vmatmul.mubr.f32.gmra.mrb[0].mxu0 %v95
    %v167 = vpop.f32.mrb[0].mxu0
    %v168 = vadd.f32 0.0, %v167
    %v169 = vpop.f32.mrb[0].mxu0
    %170 = vdwg.mxu0
    %171 = vmatprep.subr.mxu0 0.0
    %172 = vmatpush1.msra.mxu0 %v75
    %173 = vmatprep.subr.mxu0 0.0
    %174 = vmatpush1.msra.mxu0 %v76
    %175 = vmatprep.subr.mxu0 0.0
    %176 = vmatpush1.msra.mxu0 %v77
    %177 = vmatprep.subr.mxu0 0.0
    %178 = vmatpush1.msra.mxu0 %v78
    %179 = vmatprep.subr.mxu0 0.0
    %180 = vmatpush1.msra.mxu0 %v79
    %181 = vmatprep.subr.mxu0 0.0
    %182 = vmatpush1.msra.mxu0 %v80
    %183 = vmatprep.subr.mxu0 0.0
    %184 = vmatpush1.msra.mxu0 %v81
    %185 = vmatprep.subr.mxu0 0.0
    %186 = vmatpush1.msra.mxu0 %v82
    %187 = vmatprep.subr.mxu0 0.0
    %188 = vmatpush1.msra.mxu0 %v83
    %189 = vmatprep.subr.mxu0 0.0
    %190 = vmatpush1.msra.mxu0 %v84
    %191 = vmatprep.subr.mxu0 0.0
    %192 = vmatpush1.msra.mxu0 %v85
    %193 = vmatprep.subr.mxu0 0.0
    %194 = vmatpush1.msra.mxu0 %v86
    %195 = vmatprep.subr.mxu0 0.0
    %196 = vmatpush1.msra.mxu0 %v87
    %197 = vmatprep.subr.mxu0 0.0
    %198 = vmatpush1.msra.mxu0 %v88
    %199 = vmatprep.subr.mxu0 0.0
    %200 = vmatpush1.msra.mxu0 %v89
    %201 = vmatprep.subr.mxu0 0.0
    %202 = vmatpush1.msra.mxu0 %v90
    %203 = vmatprep.subr.mxu0 0.0
    %204 = vmatpush1.msra.mxu0 0.0
    %205 = vmatprep.subr.mxu0 0.0
    %206 = vmatpush1.msra.mxu0 0.0
    %207 = vmatprep.subr.mxu0 0.0
    %208 = vmatpush1.msra.mxu0 0.0
    %209 = vmatprep.subr.mxu0 0.0
    %210 = vmatpush1.msra.mxu0 0.0
    %211 = vmatprep.subr.mxu0 0.0
    %212 = vmatpush1.msra.mxu0 0.0
    %213 = vmatprep.subr.mxu0 0.0
    %214 = vmatpush1.msra.mxu0 0.0
    %215 = vmatprep.subr.mxu0 0.0
    %216 = vmatpush1.msra.mxu0 0.0
    %217 = vmatprep.subr.mxu0 0.0
    %218 = vmatpush1.msra.mxu0 0.0
    %219 = vmatprep.subr.mxu0 0.0
    %220 = vmatpush1.msra.mxu0 0.0
    %221 = vmatprep.subr.mxu0 0.0
    %222 = vmatpush1.msra.mxu0 0.0
    %223 = vmatprep.subr.mxu0 0.0
    %224 = vmatpush1.msra.mxu0 0.0
    %225 = vmatprep.subr.mxu0 0.0
    %226 = vmatpush1.msra.mxu0 0.0
    %227 = vmatprep.subr.mxu0 0.0
    %228 = vmatpush1.msra.mxu0 0.0
    %229 = vmatprep.subr.mxu0 0.0
    %230 = vmatpush1.msra.mxu0 0.0
    %231 = vmatprep.subr.mxu0 0.0
    %232 = vmatpush1.msra.mxu0 0.0
    %233 = vmatprep.subr.mxu0 0.0
    %234 = vmatpush1.msra.mxu0 0.0
    %235 = vmatprep.mubr.f32.mxu0 0.0
    %236 = vmatmul.mubr.f32.gmra.mrb[0].mxu0 %v74
    %v237 = vpop.f32.mrb[0].mxu0
    %v238 = vadd.f32 %v168, %v237
    %v239 = vpop.f32.mrb[0].mxu0
    %240 = vdwg.mxu0
    %v241 = vld [vmem:[%s4] sm:$0x1]
    %v243 = vlaneseq
    %v244 = vshrl.u32 %v243, 7
    %v245 = vsub.s32 0, %v244
    %v246 = vrot.slane %v241, %v245
    %v248 = vadd.f32 %v238, %v246
    %v249 = vmax.f32 %v248, 0.0
    %v250 = vld [vmem:[#allocation5] sm:$0xff]
    %v251 = vld [vmem:[#allocation5 + $0x8] sm:$0xff]
    %v252 = vld [vmem:[#allocation5 + $0x10] sm:$0xff]
    %v253 = vld [vmem:[#allocation5 + $0x18] sm:$0xff]
    %v254 = vld [vmem:[#allocation5 + $0x20] sm:$0xff]
    %v255 = vld [vmem:[#allocation5 + $0x28] sm:$0xff]
    %v256 = vld [vmem:[#allocation5 + $0x30] sm:$0xff]
    %v257 = vld [vmem:[#allocation5 + $0x38] sm:$0xff]
    %v258 = vld [vmem:[#allocation5 + $0x40] sm:$0xff]
    %v259 = vld [vmem:[#allocation5 + $0x48] sm:$0xff]
    %v260 = vld [vmem:[#allocation5 + $0x50] sm:$0xff]
    %v261 = vld [vmem:[#allocation5 + $0x58] sm:$0xff]
    %v262 = vld [vmem:[#allocation5 + $0x60] sm:$0xff]
    %v263 = vld [vmem:[#allocation5 + $0x68] sm:$0xff]
    %v264 = vld [vmem:[#allocation5 + $0x70] sm:$0xff]
    %v265 = vld [vmem:[#allocation5 + $0x78] sm:$0xff]
    %v266 = vld [vmem:[%s6] sm:$0x1]
    %v268 = vlaneseq
    %v269 = vshrl.u32 %v268, 7
    %v270 = vsub.s32 0, %v269
    %v271 = vrot.slane %v266, %v270
    %273 = vmatprep.subr.mxu0 0.0
    %274 = vmatpush1.msra.mxu0 %v250
    %275 = vmatprep.subr.mxu0 0.0
    %276 = vmatpush1.msra.mxu0 %v251
    %277 = vmatprep.subr.mxu0 0.0
    %278 = vmatpush1.msra.mxu0 %v252
    %279 = vmatprep.subr.mxu0 0.0
    %280 = vmatpush1.msra.mxu0 %v253
    %281 = vmatprep.subr.mxu0 0.0
    %282 = vmatpush1.msra.mxu0 %v254
    %283 = vmatprep.subr.mxu0 0.0
    %284 = vmatpush1.msra.mxu0 %v255
    %285 = vmatprep.subr.mxu0 0.0
    %286 = vmatpush1.msra.mxu0 %v256
    %287 = vmatprep.subr.mxu0 0.0
    %288 = vmatpush1.msra.mxu0 %v257
    %289 = vmatprep.subr.mxu0 0.0
    %290 = vmatpush1.msra.mxu0 %v258
    %291 = vmatprep.subr.mxu0 0.0
    %292 = vmatpush1.msra.mxu0 %v259
    %293 = vmatprep.subr.mxu0 0.0
    %294 = vmatpush1.msra.mxu0 %v260
    %295 = vmatprep.subr.mxu0 0.0
    %296 = vmatpush1.msra.mxu0 %v261
    %297 = vmatprep.subr.mxu0 0.0
    %298 = vmatpush1.msra.mxu0 %v262
    %299 = vmatprep.subr.mxu0 0.0
    %300 = vmatpush1.msra.mxu0 %v263
    %301 = vmatprep.subr.mxu0 0.0
    %302 = vmatpush1.msra.mxu0 %v264
    %303 = vmatprep.subr.mxu0 0.0
    %304 = vmatpush1.msra.mxu0 %v265
    %305 = vmatprep.subr.mxu0 0.0
    %306 = vmatpush1.msra.mxu0 0.0
    %307 = vmatprep.subr.mxu0 0.0
    %308 = vmatpush1.msra.mxu0 0.0
    %309 = vmatprep.subr.mxu0 0.0
    %310 = vmatpush1.msra.mxu0 0.0
    %311 = vmatprep.subr.mxu0 0.0
    %312 = vmatpush1.msra.mxu0 0.0
    %313 = vmatprep.subr.mxu0 0.0
    %314 = vmatpush1.msra.mxu0 0.0
    %315 = vmatprep.subr.mxu0 0.0
    %316 = vmatpush1.msra.mxu0 0.0
    %317 = vmatprep.subr.mxu0 0.0
    %318 = vmatpush1.msra.mxu0 0.0
    %319 = vmatprep.subr.mxu0 0.0
    %320 = vmatpush1.msra.mxu0 0.0
    %321 = vmatprep.subr.mxu0 0.0
    %322 = vmatpush1.msra.mxu0 0.0
    %323 = vmatprep.subr.mxu0 0.0
    %324 = vmatpush1.msra.mxu0 0.0
    %325 = vmatprep.subr.mxu0 0.0
    %326 = vmatpush1.msra.mxu0 0.0
    %327 = vmatprep.subr.mxu0 0.0
    %328 = vmatpush1.msra.mxu0 0.0
    %329 = vmatprep.subr.mxu0 0.0
    %330 = vmatpush1.msra.mxu0 0.0
    %331 = vmatprep.subr.mxu0 0.0
    %332 = vmatpush1.msra.mxu0 0.0
    %333 = vmatprep.subr.mxu0 0.0
    %334 = vmatpush1.msra.mxu0 0.0
    %335 = vmatprep.subr.mxu0 0.0
    %336 = vmatpush1.msra.mxu0 0.0
    %337 = vmatprep.mubr.f32.mxu0 0.0
    %338 = vmatmul.mubr.f32.gmra.mrb[0].mxu0 %v249
    %v339 = vpop.f32.mrb[0].mxu0
    %v340 = vadd.f32 %v271, %v339
    %v341 = vpop.f32.mrb[0].mxu0
    %342 = vdwg.mxu0
    %v343 = vmax.f32 %v340, 0.0
    %v344 = vld [vmem:[#allocation7] sm:$0xff]
    %v345 = vld [vmem:[#allocation7 + $0x8] sm:$0xff]
    %v346 = vld [vmem:[#allocation7 + $0x10] sm:$0xff]
    %v347 = vld [vmem:[#allocation7 + $0x18] sm:$0xff]
    %v348 = vld [vmem:[#allocation7 + $0x20] sm:$0xff]
    %v349 = vld [vmem:[#allocation7 + $0x28] sm:$0xff]
    %v350 = vld [vmem:[#allocation7 + $0x30] sm:$0xff]
    %v351 = vld [vmem:[#allocation7 + $0x38] sm:$0xff]
    %v352 = vld [vmem:[#allocation7 + $0x40] sm:$0xff]
    %v353 = vld [vmem:[#allocation7 + $0x48] sm:$0xff]
    %v354 = vld [vmem:[#allocation7 + $0x50] sm:$0xff]
    %v355 = vld [vmem:[#allocation7 + $0x58] sm:$0xff]
    %v356 = vld [vmem:[#allocation7 + $0x60] sm:$0xff]
    %v357 = vld [vmem:[#allocation7 + $0x68] sm:$0xff]
    %v358 = vld [vmem:[#allocation7 + $0x70] sm:$0xff]
    %v359 = vld [vmem:[#allocation7 + $0x78] sm:$0xff]
    %v360 = vld [vmem:[%s8] sm:$0x1]
    %v362 = vlaneseq
    %v363 = vshrl.u32 %v362, 7
    %v364 = vsub.s32 0, %v363
    %v365 = vrot.slane %v360, %v364
    %367 = vmatprep.subr.mxu0 0.0
    %368 = vmatpush1.msra.mxu0 %v344
    %369 = vmatprep.subr.mxu0 0.0
    %370 = vmatpush1.msra.mxu0 %v345
    %371 = vmatprep.subr.mxu0 0.0
    %372 = vmatpush1.msra.mxu0 %v346
    %373 = vmatprep.subr.mxu0 0.0
    %374 = vmatpush1.msra.mxu0 %v347
    %375 = vmatprep.subr.mxu0 0.0
    %376 = vmatpush1.msra.mxu0 %v348
    %377 = vmatprep.subr.mxu0 0.0
    %378 = vmatpush1.msra.mxu0 %v349
    %379 = vmatprep.subr.mxu0 0.0
    %380 = vmatpush1.msra.mxu0 %v350
    %381 = vmatprep.subr.mxu0 0.0
    %382 = vmatpush1.msra.mxu0 %v351
    %383 = vmatprep.subr.mxu0 0.0
    %384 = vmatpush1.msra.mxu0 %v352
    %385 = vmatprep.subr.mxu0 0.0
    %386 = vmatpush1.msra.mxu0 %v353
    %387 = vmatprep.subr.mxu0 0.0
    %388 = vmatpush1.msra.mxu0 %v354
    %389 = vmatprep.subr.mxu0 0.0
    %390 = vmatpush1.msra.mxu0 %v355
    %391 = vmatprep.subr.mxu0 0.0
    %392 = vmatpush1.msra.mxu0 %v356
    %393 = vmatprep.subr.mxu0 0.0
    %394 = vmatpush1.msra.mxu0 %v357
    %395 = vmatprep.subr.mxu0 0.0
    %396 = vmatpush1.msra.mxu0 %v358
    %397 = vmatprep.subr.mxu0 0.0
    %398 = vmatpush1.msra.mxu0 %v359
    %399 = vmatprep.subr.mxu0 0.0
    %400 = vmatpush1.msra.mxu0 0.0
    %401 = vmatprep.subr.mxu0 0.0
    %402 = vmatpush1.msra.mxu0 0.0
    %403 = vmatprep.subr.mxu0 0.0
    %404 = vmatpush1.msra.mxu0 0.0
    %405 = vmatprep.subr.mxu0 0.0
    %406 = vmatpush1.msra.mxu0 0.0
    %407 = vmatprep.subr.mxu0 0.0
    %408 = vmatpush1.msra.mxu0 0.0
    %409 = vmatprep.subr.mxu0 0.0
    %410 = vmatpush1.msra.mxu0 0.0
    %411 = vmatprep.subr.mxu0 0.0
    %412 = vmatpush1.msra.mxu0 0.0
    %413 = vmatprep.subr.mxu0 0.0
    %414 = vmatpush1.msra.mxu0 0.0
    %415 = vmatprep.subr.mxu0 0.0
    %416 = vmatpush1.msra.mxu0 0.0
    %417 = vmatprep.subr.mxu0 0.0
    %418 = vmatpush1.msra.mxu0 0.0
    %419 = vmatprep.subr.mxu0 0.0
    %420 = vmatpush1.msra.mxu0 0.0
    %421 = vmatprep.subr.mxu0 0.0
    %422 = vmatpush1.msra.mxu0 0.0
    %423 = vmatprep.subr.mxu0 0.0
    %424 = vmatpush1.msra.mxu0 0.0
    %425 = vmatprep.subr.mxu0 0.0
    %426 = vmatpush1.msra.mxu0 0.0
    %427 = vmatprep.subr.mxu0 0.0
    %428 = vmatpush1.msra.mxu0 0.0
    %429 = vmatprep.subr.mxu0 0.0
    %430 = vmatpush1.msra.mxu0 0.0
    %431 = vmatprep.mubr.f32.mxu0 0.0
    %432 = vmatmul.mubr.f32.gmra.mrb[0].mxu0 %v343
    %v433 = vpop.f32.mrb[0].mxu0
    %v434 = vadd.f32 %v365, %v433
    %v435 = vpop.f32.mrb[0].mxu0
    %436 = vdwg.mxu0
    %v437 = vmul.f32 %v434, 0.1
    %v438 = vadd.f32 %v74, %v437
    %439 = vst [vmem:[#allocation8] sm:$0xff] %v438
    // Predicated region
    $region50: #{tpu_custom_call.1} parent=1 // pred_check
      _
    $region51: #{tpu_custom_call.1} parent=1 // pred_check_branch
      %441 = sbr.rel (0) target = $region53
    $region52: #{tpu_custom_call.1} parent=1 // pred_region
      %s443 = ssub.s32 128, 128
      %444 = vsyncadd [#allocation4], %s443
      %s446 = sshll.u32 [#allocation8], 4
      %s447 = int_to_ptr.vmem [resolvable:$true] %s446
      %449 = dma.vmem_to_hbm [thread:$0]  %s447, 128, %s9, [#allocation4]
    $region53: #{tpu_custom_call.1} parent=1 // pred_fallthru
      _
    // Predicated region
    $region54: #{tpu_custom_call.1} parent=1 // pred_check
      _
    $region55: #{tpu_custom_call.1} parent=1 // pred_check_branch
      %451 = sbr.rel (0) target = $region57
    $region56: #{tpu_custom_call.1} parent=1 // pred_region
      %452 = dma.done [#allocation4], 128
    $region57: #{tpu_custom_call.1} parent=1 // pred_fallthru
      _
    %453 = vsyncpa [#allocation3], 1
    %454 = vsyncpa [#allocation6], 1
    %455 = vsyncpa [#allocation4], 1

</llo_original>
